<compile_context>
chip_gen: v7x
topology: tpu7x:2x2x1
jax: 0.10.0
libtpu: 0.0.40
codegen_flags: <defaults>
</compile_context>

<pallas_src>
import functools

import jax
import jax.numpy as jnp
from jax.experimental import pallas as pl
from jax.experimental.pallas import tpu as pltpu


def _round_up(x, m):
    return ((x + m - 1) // m) * m


def mlp_kernel(x_ref, w1_ref, b1_ref, w2_ref, b2_ref, o_ref, acc_ref):
    # x_ref:  (tm, E)  bf16       w1_ref: (E, tH) bf16    b1_ref: (1, tH) f32
    # w2_ref: (tH, E)  bf16       b2_ref: (1, E)  f32
    # o_ref:  (tm, E)  out dtype  acc_ref: (tm, E) f32 accumulator (reduction over H tiles)
    j = pl.program_id(1)

    @pl.when(j == 0)
    def _():
        acc_ref[...] = jnp.zeros_like(acc_ref)

    # linear1 slice: x @ W1^T[:, hblk] + b1[hblk]   (MXU bf16, f32 accumulate)
    h = jnp.dot(x_ref[...], w1_ref[...], preferred_element_type=jnp.float32)
    h = h + b1_ref[...]
    # dropout (eval mode) -> identity; tanh-approx GELU (lowers to EUP)
    h = jax.nn.gelu(h, approximate=True)
    # linear2 partial: GELU(h_blk) @ W2^T[hblk, :]; dropout -> identity
    acc_ref[...] += jnp.dot(h.astype(w2_ref.dtype), w2_ref[...],
                            preferred_element_type=jnp.float32)

    @pl.when(j == pl.num_programs(1) - 1)
    def _():
        o_ref[...] = (acc_ref[...] + b2_ref[...]).astype(o_ref.dtype)


@functools.partial(jax.jit, static_argnames=("tm", "th"))
def mlp_pallas(x2d, w1_t, b1, w2_t, b2, *, tm=256, th=512):
    M, E = x2d.shape
    H = w1_t.shape[1]
    out_dtype = x2d.dtype

    # Shrink tiles for small problems; keep them 128-multiples (MXU / bf16 tiling).
    tm = min(tm, _round_up(M, 128))
    th = min(th, H)
    assert E % 128 == 0, "embedd_dim must be a multiple of 128"
    assert th % 128 == 0 and H % th == 0, "hidden tile must divide H and be a 128 multiple"

    # Pad token dim to a multiple of tm (rows are independent; padding sliced off).
    M_pad = _round_up(M, tm)
    x_p = x2d if M_pad == M else jnp.pad(x2d, ((0, M_pad - M), (0, 0)))

    # bf16 matmul operands; f32 biases for the epilogue.
    x_bf = x_p.astype(jnp.bfloat16)
    w1_bf = w1_t.astype(jnp.bfloat16)
    w2_bf = w2_t.astype(jnp.bfloat16)
    b1_f = b1.reshape(1, H).astype(jnp.float32)
    b2_f = b2.reshape(1, E).astype(jnp.float32)

    # VMEM budget: double-buffered x/out tiles + weight slices + biases + accumulator.
    out_bytes = jnp.dtype(out_dtype).itemsize
    vmem_est = (2 * tm * E * 2          # x tile (bf16), double-buffered
                + 2 * E * th * 2        # W1 slice (bf16)
                + 2 * th * E * 2        # W2 slice (bf16)
                + 2 * th * 4 + 2 * E * 4   # biases (f32)
                + 2 * tm * E * out_bytes   # output tile
                + tm * E * 4)           # f32 accumulator scratch
    vmem_limit = min(int(vmem_est * 2) + (8 << 20), 100 << 20)

    grid = (M_pad // tm, H // th)
    out = pl.pallas_call(
        mlp_kernel,
        out_shape=jax.ShapeDtypeStruct((M_pad, E), out_dtype),
        grid_spec=pltpu.PrefetchScalarGridSpec(
            num_scalar_prefetch=0,
            grid=grid,
            in_specs=[
                pl.BlockSpec((tm, E), lambda i, j: (i, 0)),   # x tile
                pl.BlockSpec((E, th), lambda i, j: (0, j)),   # W1^T slice
                pl.BlockSpec((1, th), lambda i, j: (0, j)),   # b1 slice
                pl.BlockSpec((th, E), lambda i, j: (j, 0)),   # W2^T slice
                pl.BlockSpec((1, E), lambda i, j: (0, 0)),    # b2
            ],
            out_specs=pl.BlockSpec((tm, E), lambda i, j: (i, 0)),
            scratch_shapes=[pltpu.VMEM((tm, E), jnp.float32)],
        ),
        compiler_params=pltpu.CompilerParams(
            dimension_semantics=("parallel", "arbitrary"),
            vmem_limit_bytes=vmem_limit,
        ),
    )(x_bf, w1_bf, b1_f, w2_bf, b2_f)
    return out[:M]


def mlp_reference(x2d, w1_t, b1, w2_t, b2):
    # Full-precision exact-GELU reference (matches nn.Linear -> nn.GELU -> nn.Linear).
    h = x2d.astype(jnp.float32) @ w1_t.astype(jnp.float32) + b1
    h = jax.nn.gelu(h, approximate=False)
    return h @ w2_t.astype(jnp.float32) + b2


if __name__ == "__main__":
    # Small config consistent with the module (scaled down from 768/3072, 4x ratio kept).
    batch, seq = 2, 8
    embedd_dim = 128
    hidden_dimension = 512

    key = jax.random.PRNGKey(0)
    kx, kw1, kb1, kw2, kb2 = jax.random.split(key, 5)

    # Input: (batch, seq, embedd_dim)
    x = jax.random.normal(kx, (batch, seq, embedd_dim), dtype=jnp.float32)

    # nn.Linear params: weight (out, in), bias (out,), deterministic init.
    w1 = jax.random.normal(kw1, (hidden_dimension, embedd_dim), jnp.float32) * 0.02
    b1 = jax.random.normal(kb1, (hidden_dimension,), jnp.float32) * 0.02
    w2 = jax.random.normal(kw2, (embedd_dim, hidden_dimension), jnp.float32) * 0.02
    b2 = jax.random.normal(kb2, (embedd_dim,), jnp.float32) * 0.02

    # Kernel-friendly layouts: transpose weights so the contraction is on the
    # left operand's last dim; keep biases 2-D (1, out) for lane-dense broadcast.
    w1_t = w1.T                      # (E, H)
    b1_r = b1.reshape(1, -1)         # (1, H)
    w2_t = w2.T                      # (H, E)
    b2_r = b2.reshape(1, -1)         # (1, E)

    x2d = x.reshape(batch * seq, embedd_dim)   # (M, E)

    # th=256 so the small demo exercises the H-tiled accumulator path (2 H steps).
    out2d = mlp_pallas(x2d, w1_t, b1_r, w2_t, b2_r, tm=256, th=256)
    out = out2d.reshape(batch, seq, embedd_dim)
    jax.block_until_ready(out)

    ref = mlp_reference(x2d, w1_t, b1_r, w2_t, b2_r).reshape(batch, seq, embedd_dim)
    assert jnp.allclose(out, ref, atol=5e-3, rtol=5e-2), "mismatch vs reference"

    print("KERNEL_OK")
</pallas_src>

<mosaic_0001>
module attributes {stable_mosaic.version = 11 : i64} {
  func.func @mlp_kernel(%arg0: i32, %arg1: i32, %arg2: memref<128x128xbf16, #tpu.memory_space<vmem>>, %arg3: memref<128x256xbf16, #tpu.memory_space<vmem>>, %arg4: memref<1x256xf32, #tpu.memory_space<vmem>>, %arg5: memref<256x128xbf16, #tpu.memory_space<vmem>>, %arg6: memref<1x128xf32, #tpu.memory_space<vmem>>, %arg7: memref<128x128xf32, #tpu.memory_space<vmem>>, %arg8: memref<128x128xf32, #tpu.memory_space<vmem>>) attributes {dimension_semantics = [#tpu.dimension_semantics<parallel>, #tpu.dimension_semantics<arbitrary>], iteration_bounds = array<i64: 1, 2>, scalar_prefetch = 0 : i64, scratch_operands = 1 : i64, tpu.core_type = #tpu.core_type<tc>, window_params = [{transform_indices = @transform_0, window_bounds = array<i64: 128, 128>}, {transform_indices = @transform_1, window_bounds = array<i64: 128, 256>}, {transform_indices = @transform_2, window_bounds = array<i64: 1, 256>}, {transform_indices = @transform_3, window_bounds = array<i64: 256, 128>}, {pipeline_mode = #tpu.pipeline_mode<synchronous>, transform_indices = @transform_4, window_bounds = array<i64: 1, 128>}, {transform_indices = @transform_5, window_bounds = array<i64: 128, 128>}]} {
    %c0_i32 = arith.constant 0 : i32
    %0 = arith.cmpi eq, %arg1, %c0_i32 : i32
    %1 = arith.extui %0 : i1 to i32
    %c0_i32_0 = arith.constant 0 : i32
    %2 = arith.cmpi ne, %1, %c0_i32_0 : i32
    scf.if %2 {
      %cst_18 = arith.constant 0.000000e+00 : f32
      %31 = vector.broadcast %cst_18 : f32 to vector<128x128xf32>
      %c0_19 = arith.constant 0 : index
      %c0_20 = arith.constant 0 : index
      %32 = vector.load %arg8[%c0_19, %c0_20] : memref<128x128xf32, #tpu.memory_space<vmem>>, vector<128x128xf32>
      tpu.vector_store %arg8[%c0_19, %c0_20], %31 {strides = array<i32>} : memref<128x128xf32, #tpu.memory_space<vmem>>, vector<128x128xf32>,
    } else {
    }
    %c0 = arith.constant 0 : index
    %c0_1 = arith.constant 0 : index
    %3 = vector.load %arg2[%c0, %c0_1] : memref<128x128xbf16, #tpu.memory_space<vmem>>, vector<128x128xbf16>
    %c0_2 = arith.constant 0 : index
    %c0_3 = arith.constant 0 : index
    %4 = vector.load %arg3[%c0_2, %c0_3] : memref<128x256xbf16, #tpu.memory_space<vmem>>, vector<128x256xbf16>
    %cst = arith.constant dense<0.000000e+00> : vector<128x256xf32>
    %5 = tpu.matmul %3, %4, %cst {dimension_numbers = #tpu.dot_dimension_numbers<[1], [0], [0], [1], [0, 0, 1, 1], [], []>} : vector<128x128xbf16>, vector<128x256xbf16>, vector<128x256xf32> -> vector<128x256xf32>
    %c0_4 = arith.constant 0 : index
    %c0_5 = arith.constant 0 : index
    %6 = vector.load %arg4[%c0_4, %c0_5] : memref<1x256xf32, #tpu.memory_space<vmem>>, vector<1x256xf32>
    %7 = vector.broadcast %6 : vector<1x256xf32> to vector<128x256xf32>
    %8 = arith.addf %5, %7 : vector<128x256xf32>
    %9 = arith.mulf %8, %8 : vector<128x256xf32>
    %10 = arith.mulf %8, %9 : vector<128x256xf32>
    %cst_6 = arith.constant 4.471500e-02 : f32
    %11 = vector.broadcast %cst_6 : f32 to vector<128x256xf32>
    %12 = arith.mulf %11, %10 : vector<128x256xf32>
    %13 = arith.addf %8, %12 : vector<128x256xf32>
    %cst_7 = arith.constant 0.797884583 : f32
    %14 = vector.broadcast %cst_7 : f32 to vector<128x256xf32>
    %15 = arith.mulf %14, %13 : vector<128x256xf32>
    %16 = math.tanh %15 : vector<128x256xf32>
    %cst_8 = arith.constant 1.000000e+00 : f32
    %17 = vector.broadcast %cst_8 : f32 to vector<128x256xf32>
    %18 = arith.addf %17, %16 : vector<128x256xf32>
    %cst_9 = arith.constant 5.000000e-01 : f32
    %19 = vector.broadcast %cst_9 : f32 to vector<128x256xf32>
    %20 = arith.mulf %19, %18 : vector<128x256xf32>
    %21 = arith.mulf %8, %20 : vector<128x256xf32>
    %c0_10 = arith.constant 0 : index
    %c0_11 = arith.constant 0 : index
    %22 = vector.load %arg8[%c0_10, %c0_11] : memref<128x128xf32, #tpu.memory_space<vmem>>, vector<128x128xf32>
    %23 = arith.truncf %21 : vector<128x256xf32> to vector<128x256xbf16>
    %c0_12 = arith.constant 0 : index
    %c0_13 = arith.constant 0 : index
    %24 = vector.load %arg5[%c0_12, %c0_13] : memref<256x128xbf16, #tpu.memory_space<vmem>>, vector<256x128xbf16>
    %cst_14 = arith.constant dense<0.000000e+00> : vector<128x128xf32>
    %25 = tpu.matmul %23, %24, %cst_14 {dimension_numbers = #tpu.dot_dimension_numbers<[1], [0], [0], [1], [0, 0, 1, 1], [], []>} : vector<128x256xbf16>, vector<256x128xbf16>, vector<128x128xf32> -> vector<128x128xf32>
    %26 = arith.addf %22, %25 : vector<128x128xf32>
    %c0_15 = arith.constant 0 : index
    %c0_16 = arith.constant 0 : index
    %27 = vector.load %arg8[%c0_15, %c0_16] : memref<128x128xf32, #tpu.memory_space<vmem>>, vector<128x128xf32>
    tpu.vector_store %arg8[%c0_15, %c0_16], %26 {strides = array<i32>} : memref<128x128xf32, #tpu.memory_space<vmem>>, vector<128x128xf32>,
    %c1_i32 = arith.constant 1 : i32
    %28 = arith.cmpi eq, %arg1, %c1_i32 : i32
    %29 = arith.extui %28 : i1 to i32
    %c0_i32_17 = arith.constant 0 : i32
    %30 = arith.cmpi ne, %29, %c0_i32_17 : i32
    scf.if %30 {
      %c0_18 = arith.constant 0 : index
      %c0_19 = arith.constant 0 : index
      %31 = vector.load %arg8[%c0_18, %c0_19] : memref<128x128xf32, #tpu.memory_space<vmem>>, vector<128x128xf32>
      %c0_20 = arith.constant 0 : index
      %c0_21 = arith.constant 0 : index
      %32 = vector.load %arg6[%c0_20, %c0_21] : memref<1x128xf32, #tpu.memory_space<vmem>>, vector<1x128xf32>
      %33 = vector.broadcast %32 : vector<1x128xf32> to vector<128x128xf32>
      %34 = arith.addf %31, %33 : vector<128x128xf32>
      %c0_22 = arith.constant 0 : index
      %c0_23 = arith.constant 0 : index
      %35 = vector.load %arg7[%c0_22, %c0_23] : memref<128x128xf32, #tpu.memory_space<vmem>>, vector<128x128xf32>
      tpu.vector_store %arg7[%c0_22, %c0_23], %34 {strides = array<i32>} : memref<128x128xf32, #tpu.memory_space<vmem>>, vector<128x128xf32>,
    } else {
    }
    return
  }
  func.func @transform_0(%arg0: i32, %arg1: i32) -> (i32, i32) {
    %c0_i32 = arith.constant 0 : i32
    %c0_i32_0 = arith.constant 0 : i32
    return %arg0, %c0_i32 : i32, i32
  }
  func.func @transform_1(%arg0: i32, %arg1: i32) -> (i32, i32) {
    %c0_i32 = arith.constant 0 : i32
    %c0_i32_0 = arith.constant 0 : i32
    return %c0_i32, %arg1 : i32, i32
  }
  func.func @transform_2(%arg0: i32, %arg1: i32) -> (i32, i32) {
    %c0_i32 = arith.constant 0 : i32
    %c0_i32_0 = arith.constant 0 : i32
    return %c0_i32, %arg1 : i32, i32
  }
  func.func @transform_3(%arg0: i32, %arg1: i32) -> (i32, i32) {
    %c0_i32 = arith.constant 0 : i32
    %c0_i32_0 = arith.constant 0 : i32
    return %arg1, %c0_i32 : i32, i32
  }
  func.func @transform_4(%arg0: i32, %arg1: i32) -> (i32, i32) {
    %c0_i32 = arith.constant 0 : i32
    %c0_i32_0 = arith.constant 0 : i32
    %c0_i32_1 = arith.constant 0 : i32
    return %c0_i32, %c0_i32_0 : i32, i32
  }
  func.func @transform_5(%arg0: i32, %arg1: i32) -> (i32, i32) {
    %c0_i32 = arith.constant 0 : i32
    %c0_i32_0 = arith.constant 0 : i32
    return %arg0, %c0_i32 : i32, i32
  }
}

</mosaic_0001>

<llo_original>
// kernel: mlp_pallas.1
$region0: #{mlp_pallas.1}
  #allocation0 [shape = 'u32[]', space=smem, size = 0x4, offset = 0x4, fixed_abs, tag = 'smem constant byte address 0x4 - core index']
  #allocation1 [shape = 'u32[144,128]{1,0:T(1,128)}', space=vmem, size = 0x12000, scoped, tag = 'internal scratch']
  #allocation2 [shape = 'f32[128,128]{1,0:T(8,128)}', space=vmem, size = 0x10000, scoped, tag = 'scratch operand']
  %s0 = inlined_call_operand.vmem [shape: bf16[128,128], index: 0, kind: input, shape index: {}]
  %s1 = inlined_call_operand.vmem [shape: bf16[128,512], index: 1, kind: input, shape index: {}]
  %s2 = inlined_call_operand.vmem [shape: f32[1,512], index: 2, kind: input, shape index: {}]
  %s3 = inlined_call_operand.vmem [shape: bf16[512,128], index: 3, kind: input, shape index: {}]
  %s4 = inlined_call_operand.vmem [shape: f32[1,128], index: 4, kind: input, shape index: {}]
  %s5 = inlined_call_operand.vmem [shape: f32[128,128], index: 5, kind: output, shape index: {}]
  %s6 = sld [smem:[#allocation0]]
  $region99: #{mlp_pallas.1} parent=0
    _
  %s8 = ssub.s32 1, %s6
  %s9 = scalar_select 0, %s8, %s6
  $region1: #{mlp_pallas.1} parent=0
    #allocation3 [shape = 'u8[131072]{0}', space=vmem, size = 0x20000, scoped, tag = 'input window, operand 1']
    loop: start=0, step=1, limit=4
    $region2: #{mlp_pallas.1} parent=1 // loop_pre_header
      _
    $region3: #{mlp_pallas.1} parent=1 // loop_header
      %s11 = sphi 0, %s15
      %p12 = scmp.ge.s32.totalorder %s11, 4
      %s18 = sphi 0, %s30
      %s19 = sphi 0, %s26
      %s20 = sphi 0, %s18
      %s21 = sphi 0, %s19
      %s22 = sphi 0, %s20
      %s23 = sphi 0, %s21
      %s33 = sphi 0, %s35
      %s36 = sphi 0, %s33
      %s37 = sphi 0, %s36
      %s53 = sphi 0, %s37
      %s59 = sphi 0, %s61
      %s62 = sphi 0, %s59
      %s63 = sphi 0, %s62
      %s79 = sphi 0, %s63
      %s85 = sphi 0, %s87
      %s88 = sphi 0, %s85
      %s89 = sphi 0, %s88
      %s105 = sphi 0, %s89
      %s111 = sphi 0, %s113
      %s114 = sphi 0, %s111
      %s115 = sphi 0, %s114
      %s131 = sphi 0, %s115
      %s135 = sphi 0, %s135
      %s137 = sphi 0, %s135
      %s138 = sphi 0, %s137
      %s152 = sphi 0, %s138
      %s158 = sphi 0, %s160
      %s161 = sphi 0, %s158
      %s162 = sphi 0, %s161
      %s178 = sphi 0, %s162
    $region4: #{mlp_pallas.1} parent=1 // loop_header_branch
      %14 = sbr.rel (%p12) target = $region8
    $region5: #{mlp_pallas.1} parent=1 // loop_body
      %s16 = ssub.s32 %s11, 1
      %s17 = ssub.s32 %s11, 2
      %s24 = sadd.s32 1, %s19
      %p25 = scmp.ge.s32.totalorder %s24, 2
      %s26 = scalar_select %p25, 0, %s24
      %s27 = sadd.s32 1, %s18
      %s28 = scalar_select %p25, %s27, %s18
      %p29 = scmp.ge.s32.totalorder %s28, 1
      %s30 = scalar_select %p29, 0, %s28
      %s31 = ssub.s32 %s18, %s30
      %p32 = scmp.eq.s32.totalorder %s31, 0
      %s34 = sadd.s32 %s33, 1
      %s35 = scalar_select %p32, %s33, %s34
      %p38 = pneg %p32
      %p39 = scmp.eq.s32.totalorder %s11, 1
      %p40 = por %p38, %p39
      %p41 = scmp.ne.s32.totalorder %s33, %s36
      %p42 = scmp.eq.s32.totalorder %s11, 0
      %p43 = por %p41, %p42
      %p44 = scmp.ne.s32.totalorder %s33, %s36
      %p45 = scmp.eq.s32.totalorder %s16, 1
      %p46 = por %p44, %p45
      %p47 = scmp.ne.s32.totalorder %s36, %s37
      %p48 = scmp.eq.s32.totalorder %s16, 0
      %p49 = por %p47, %p48
      %p50 = scmp.ne.s32.totalorder %s36, %s37
      %p51 = scmp.eq.s32.totalorder %s17, 1
      %p52 = por %p50, %p51
      %p54 = scmp.ne.s32.totalorder %s37, %s53
      %p55 = scmp.eq.s32.totalorder %s17, 0
      %p56 = por %p54, %p55
      %s57 = ssub.s32 %s19, %s26
      %p58 = scmp.eq.s32.totalorder %s57, 0
      %s60 = sadd.s32 %s59, 1
      %s61 = scalar_select %p58, %s59, %s60
      %p64 = pneg %p58
      %p65 = scmp.eq.s32.totalorder %s11, 1
      %p66 = por %p64, %p65
      %p67 = scmp.ne.s32.totalorder %s59, %s62
      %p68 = scmp.eq.s32.totalorder %s11, 0
      %p69 = por %p67, %p68
      %p70 = scmp.ne.s32.totalorder %s59, %s62
      %p71 = scmp.eq.s32.totalorder %s16, 1
      %p72 = por %p70, %p71
      %p73 = scmp.ne.s32.totalorder %s62, %s63
      %p74 = scmp.eq.s32.totalorder %s16, 0
      %p75 = por %p73, %p74
      %p76 = scmp.ne.s32.totalorder %s62, %s63
      %p77 = scmp.eq.s32.totalorder %s17, 1
      %p78 = por %p76, %p77
      %p80 = scmp.ne.s32.totalorder %s63, %s79
      %p81 = scmp.eq.s32.totalorder %s17, 0
      %p82 = por %p80, %p81
      %s83 = ssub.s32 %s19, %s26
      %p84 = scmp.eq.s32.totalorder %s83, 0
      %s86 = sadd.s32 %s85, 1
      %s87 = scalar_select %p84, %s85, %s86
      %p90 = pneg %p84
      %p91 = scmp.eq.s32.totalorder %s11, 1
      %p92 = por %p90, %p91
      %p93 = scmp.ne.s32.totalorder %s85, %s88
      %p94 = scmp.eq.s32.totalorder %s11, 0
      %p95 = por %p93, %p94
      %p96 = scmp.ne.s32.totalorder %s85, %s88
      %p97 = scmp.eq.s32.totalorder %s16, 1
      %p98 = por %p96, %p97
      %p99 = scmp.ne.s32.totalorder %s88, %s89
      %p100 = scmp.eq.s32.totalorder %s16, 0
      %p101 = por %p99, %p100
      %p102 = scmp.ne.s32.totalorder %s88, %s89
      %p103 = scmp.eq.s32.totalorder %s17, 1
      %p104 = por %p102, %p103
      %p106 = scmp.ne.s32.totalorder %s89, %s105
      %p107 = scmp.eq.s32.totalorder %s17, 0
      %p108 = por %p106, %p107
      %s109 = ssub.s32 %s19, %s26
      %p110 = scmp.eq.s32.totalorder %s109, 0
      %s112 = sadd.s32 %s111, 1
      %s113 = scalar_select %p110, %s111, %s112
      %p116 = pneg %p110
      %p117 = scmp.eq.s32.totalorder %s11, 1
      %p118 = por %p116, %p117
      %p119 = scmp.ne.s32.totalorder %s111, %s114
      %p120 = scmp.eq.s32.totalorder %s11, 0
      %p121 = por %p119, %p120
      %p122 = scmp.ne.s32.totalorder %s111, %s114
      %p123 = scmp.eq.s32.totalorder %s16, 1
      %p124 = por %p122, %p123
      %p125 = scmp.ne.s32.totalorder %s114, %s115
      %p126 = scmp.eq.s32.totalorder %s16, 0
      %p127 = por %p125, %p126
      %p128 = scmp.ne.s32.totalorder %s114, %s115
      %p129 = scmp.eq.s32.totalorder %s17, 1
      %p130 = por %p128, %p129
      %p132 = scmp.ne.s32.totalorder %s115, %s131
      %p133 = scmp.eq.s32.totalorder %s17, 0
      %p134 = por %p132, %p133
      %s136 = sadd.s32 %s135, 1
      %p139 = scmp.eq.s32.totalorder %s11, 1
      %p140 = scmp.ne.s32.totalorder %s135, %s137
      %p141 = scmp.eq.s32.totalorder %s11, 0
      %p142 = por %p140, %p141
      %p143 = scmp.ne.s32.totalorder %s135, %s137
      %p144 = scmp.eq.s32.totalorder %s16, 1
      %p145 = por %p143, %p144
      %p146 = scmp.ne.s32.totalorder %s137, %s138
      %p147 = scmp.eq.s32.totalorder %s16, 0
      %p148 = por %p146, %p147
      %p149 = scmp.ne.s32.totalorder %s137, %s138
      %p150 = scmp.eq.s32.totalorder %s17, 1
      %p151 = por %p149, %p150
      %p153 = scmp.ne.s32.totalorder %s138, %s152
      %p154 = scmp.eq.s32.totalorder %s17, 0
      %p155 = por %p153, %p154
      %s156 = ssub.s32 %s18, %s30
      %p157 = scmp.eq.s32.totalorder %s156, 0
      %s159 = sadd.s32 %s158, 1
      %s160 = scalar_select %p157, %s158, %s159
      %p163 = pneg %p157
      %p164 = scmp.eq.s32.totalorder %s11, 1
      %p165 = por %p163, %p164
      %p166 = scmp.ne.s32.totalorder %s158, %s161
      %p167 = scmp.eq.s32.totalorder %s11, 0
      %p168 = por %p166, %p167
      %p169 = scmp.ne.s32.totalorder %s158, %s161
      %p170 = scmp.eq.s32.totalorder %s16, 1
      %p171 = por %p169, %p170
      %p172 = scmp.ne.s32.totalorder %s161, %s162
      %p173 = scmp.eq.s32.totalorder %s16, 0
      %p174 = por %p172, %p173
      %p175 = scmp.ne.s32.totalorder %s161, %s162
      %p176 = scmp.eq.s32.totalorder %s17, 1
      %p177 = por %p175, %p176
      %p179 = scmp.ne.s32.totalorder %s162, %s178
      %p180 = scmp.eq.s32.totalorder %s17, 0
      %p181 = por %p179, %p180
      %p182 = scmp.le.s32.totalorder 1, %s11
      %p183 = scmp.lt.s32.totalorder %s11, 3
      %p184 = pnand %p182, %p183
      %p185 = pneg %p184
      // Predicated region
      $region9: #{mlp_pallas.1} parent=5 // pred_check
        _
      $region10: #{mlp_pallas.1} parent=5 // pred_check_branch
        %187 = sbr.rel (%p184) target = $region12
      $region11: #{mlp_pallas.1} parent=5 // pred_region
        %s188 = ssub.s32 %s11, 1
        // Predicated region
        $region13: #{mlp_pallas.1} parent=11 // pred_check
          %p189 = pneg %p49
        $region14: #{mlp_pallas.1} parent=11 // pred_check_branch
          %191 = sbr.rel (%p189) target = $region16
        $region15: #{mlp_pallas.1} parent=11 // pred_region
          %s192 = smul.u32 16, %s20
          %p193 = scmp.lt.s32.totalorder %s192, 15
          %s194 = scalar_select %p193, %s192, 15
          %s195 = smul.addr %s194, 4
          %s196 = scalar_lea.vmem %s0, %s195
          %s197 = smul.u32 16, %s20
        $region16: #{mlp_pallas.1} parent=11 // pred_fallthru
          _
        // Predicated region
        $region17: #{mlp_pallas.1} parent=11 // pred_check
          %p198 = pneg %p148
        $region18: #{mlp_pallas.1} parent=11 // pred_check_branch
          %200 = sbr.rel (%p198) target = $region20
        $region19: #{mlp_pallas.1} parent=11 // pred_region
          _
        $region20: #{mlp_pallas.1} parent=11 // pred_fallthru
          _
      $region12: #{mlp_pallas.1} parent=5 // pred_fallthru
        _
      %p201 = scmp.lt.s32.totalorder %s11, 2
      // Predicated region
      $region21: #{mlp_pallas.1} parent=5 // pred_check
        %p202 = pneg %p201
      $region22: #{mlp_pallas.1} parent=5 // pred_check_branch
        %204 = sbr.rel (%p202) target = $region24
      $region23: #{mlp_pallas.1} parent=5 // pred_region
        // Predicated region
        $region25: #{mlp_pallas.1} parent=23 // pred_check
          %p205 = pneg %p69
        $region26: #{mlp_pallas.1} parent=23 // pred_check_branch
          %207 = sbr.rel (%p205) target = $region28
        $region27: #{mlp_pallas.1} parent=23 // pred_region
          %s208 = sand.u32 %s59, 1
          %s209 = sand.u32 %s59, 1
          %s210 = smul.addr %s209, 128
          %s211 = scalar_lea.vmem [#allocation3], %s210
          %s212 = smul.u32 2, %s19
          %s213 = smul.addr %s212, 4
          %s214 = scalar_lea.vmem %s1, %s213
          // Predicated region
          $region29: #{mlp_pallas.1} parent=27 // pred_check
            _
          $region30: #{mlp_pallas.1} parent=27 // pred_check_branch
            %216 = sbr.rel (0) target = $region32
          $region31: #{mlp_pallas.1} parent=27 // pred_region
            // Predicated region
            $region33: #{mlp_pallas.1} parent=31 // pred_check
              _
            $region34: #{mlp_pallas.1} parent=31 // pred_check_branch
              %218 = sbr.rel (0) target = $region36
            $region35: #{mlp_pallas.1} parent=31 // pred_region
              // Predicated region
              $region48: #{mlp_pallas.1} parent=35 // pred_check
                _
              $region49: #{mlp_pallas.1} parent=35 // pred_check_branch
                %263 = sbr.rel (0) target = $region51
              $region50: #{mlp_pallas.1} parent=35 // pred_region
                loop: start=0, step=1, limit=1
                $region52: #{mlp_pallas.1} parent=50 // loop_pre_header
                  _
                $region53: #{mlp_pallas.1} parent=50 // loop_header
                  %s265 = sphi 0, %s269
                  %p266 = scmp.ge.s32.totalorder %s265, 1
                  %s270 = sphi %s214, %s214
                  %s271 = sphi %s211, %s211
                $region54: #{mlp_pallas.1} parent=50 // loop_header_branch
                  %268 = sbr.rel (%p266) target = $region58
                $region55: #{mlp_pallas.1} parent=50 // loop_body
                  %v272 = vld [vmem:[%s270] sm:$0xff]
                  %273 = vst [vmem:[%s271] sm:$0xff] %v272
                  %v274 = vld [vmem:[%s270 + $0x10] sm:$0xff]
                  %275 = vst [vmem:[%s271 + $0x8] sm:$0xff] %v274
                  %v276 = vld [vmem:[%s270 + $0x20] sm:$0xff]
                  %277 = vst [vmem:[%s271 + $0x10] sm:$0xff] %v276
                  %v278 = vld [vmem:[%s270 + $0x30] sm:$0xff]
                  %279 = vst [vmem:[%s271 + $0x18] sm:$0xff] %v278
                  %v280 = vld [vmem:[%s270 + $0x40] sm:$0xff]
                  %281 = vst [vmem:[%s271 + $0x20] sm:$0xff] %v280
                  %v282 = vld [vmem:[%s270 + $0x50] sm:$0xff]
                  %283 = vst [vmem:[%s271 + $0x28] sm:$0xff] %v282
                  %v284 = vld [vmem:[%s270 + $0x60] sm:$0xff]
                  %285 = vst [vmem:[%s271 + $0x30] sm:$0xff] %v284
                  %v286 = vld [vmem:[%s270 + $0x70] sm:$0xff]
                  %287 = vst [vmem:[%s271 + $0x38] sm:$0xff] %v286
                  %v288 = vld [vmem:[%s270 + $0x80] sm:$0xff]
                  %289 = vst [vmem:[%s271 + $0x40] sm:$0xff] %v288
                  %v290 = vld [vmem:[%s270 + $0x90] sm:$0xff]
                  %291 = vst [vmem:[%s271 + $0x48] sm:$0xff] %v290
                  %v292 = vld [vmem:[%s270 + $0xa0] sm:$0xff]
                  %293 = vst [vmem:[%s271 + $0x50] sm:$0xff] %v292
                  %v294 = vld [vmem:[%s270 + $0xb0] sm:$0xff]
                  %295 = vst [vmem:[%s271 + $0x58] sm:$0xff] %v294
                  %v296 = vld [vmem:[%s270 + $0xc0] sm:$0xff]
                  %297 = vst [vmem:[%s271 + $0x60] sm:$0xff] %v296
                  %v298 = vld [vmem:[%s270 + $0xd0] sm:$0xff]
                  %299 = vst [vmem:[%s271 + $0x68] sm:$0xff] %v298
                  %v300 = vld [vmem:[%s270 + $0xe0] sm:$0xff]
                  %301 = vst [vmem:[%s271 + $0x70] sm:$0xff] %v300
                  %v302 = vld [vmem:[%s270 + $0xf0] sm:$0xff]
                  %303 = vst [vmem:[%s271 + $0x78] sm:$0xff] %v302
                $region56: #{mlp_pallas.1} parent=50 // loop_footer
                  %s269 = sadd.s32 1, %s265
                $region57: #{mlp_pallas.1} parent=50 // loop_footer_branch
                  %264 = sbr.rel target = $region53
                $region58: #{mlp_pallas.1} parent=50 // loop_exit
                  _
              $region51: #{mlp_pallas.1} parent=35 // pred_fallthru
                _
              // Predicated region
              $region59: #{mlp_pallas.1} parent=35 // pred_check
                _
              $region60: #{mlp_pallas.1} parent=35 // pred_check_branch
                %305 = sbr.rel target = $region62
              $region61: #{mlp_pallas.1} parent=35 // pred_region
                _
              $region62: #{mlp_pallas.1} parent=35 // pred_fallthru
                _
            $region36: #{mlp_pallas.1} parent=31 // pred_fallthru
              _
            // Predicated region
            $region37: #{mlp_pallas.1} parent=31 // pred_check
              _
            $region38: #{mlp_pallas.1} parent=31 // pred_check_branch
              %220 = sbr.rel target = $region40
            $region39: #{mlp_pallas.1} parent=31 // pred_region
              loop: start=0, step=1, limit=1
              $region41: #{mlp_pallas.1} parent=39 // loop_pre_header
                _
              $region42: #{mlp_pallas.1} parent=39 // loop_header
                %s223 = sphi 0, %s227
                %p224 = scmp.ge.s32.totalorder %s223, 1
                %s228 = sphi %s214, %s214
                %s229 = sphi %s211, %s211
              $region43: #{mlp_pallas.1} parent=39 // loop_header_branch
                %226 = sbr.rel (%p224) target = $region47
              $region44: #{mlp_pallas.1} parent=39 // loop_body
                %v230 = vld [vmem:[%s228] sm:$0xff]
                %231 = vst [vmem:[%s229] sm:$0xff] %v230
                %v232 = vld [vmem:[%s228 + $0x10] sm:$0xff]
                %233 = vst [vmem:[%s229 + $0x8] sm:$0xff] %v232
                %v234 = vld [vmem:[%s228 + $0x20] sm:$0xff]
                %235 = vst [vmem:[%s229 + $0x10] sm:$0xff] %v234
                %v236 = vld [vmem:[%s228 + $0x30] sm:$0xff]
                %237 = vst [vmem:[%s229 + $0x18] sm:$0xff] %v236
                %v238 = vld [vmem:[%s228 + $0x40] sm:$0xff]
                %239 = vst [vmem:[%s229 + $0x20] sm:$0xff] %v238
                %v240 = vld [vmem:[%s228 + $0x50] sm:$0xff]
                %241 = vst [vmem:[%s229 + $0x28] sm:$0xff] %v240
                %v242 = vld [vmem:[%s228 + $0x60] sm:$0xff]
                %243 = vst [vmem:[%s229 + $0x30] sm:$0xff] %v242
                %v244 = vld [vmem:[%s228 + $0x70] sm:$0xff]
                %245 = vst [vmem:[%s229 + $0x38] sm:$0xff] %v244
                %v246 = vld [vmem:[%s228 + $0x80] sm:$0xff]
                %247 = vst [vmem:[%s229 + $0x40] sm:$0xff] %v246
                %v248 = vld [vmem:[%s228 + $0x90] sm:$0xff]
                %249 = vst [vmem:[%s229 + $0x48] sm:$0xff] %v248
                %v250 = vld [vmem:[%s228 + $0xa0] sm:$0xff]
                %251 = vst [vmem:[%s229 + $0x50] sm:$0xff] %v250
                %v252 = vld [vmem:[%s228 + $0xb0] sm:$0xff]
                %253 = vst [vmem:[%s229 + $0x58] sm:$0xff] %v252
                %v254 = vld [vmem:[%s228 + $0xc0] sm:$0xff]
                %255 = vst [vmem:[%s229 + $0x60] sm:$0xff] %v254
                %v256 = vld [vmem:[%s228 + $0xd0] sm:$0xff]
                %257 = vst [vmem:[%s229 + $0x68] sm:$0xff] %v256
                %v258 = vld [vmem:[%s228 + $0xe0] sm:$0xff]
                %259 = vst [vmem:[%s229 + $0x70] sm:$0xff] %v258
                %v260 = vld [vmem:[%s228 + $0xf0] sm:$0xff]
                %261 = vst [vmem:[%s229 + $0x78] sm:$0xff] %v260
              $region45: #{mlp_pallas.1} parent=39 // loop_footer
                %s227 = sadd.s32 1, %s223
              $region46: #{mlp_pallas.1} parent=39 // loop_footer_branch
                %222 = sbr.rel target = $region42
              $region47: #{mlp_pallas.1} parent=39 // loop_exit
                _
            $region40: #{mlp_pallas.1} parent=31 // pred_fallthru
              _
          $region32: #{mlp_pallas.1} parent=27 // pred_fallthru
            _
          %306 = vnop
        $region28: #{mlp_pallas.1} parent=23 // pred_fallthru
          _
        // Predicated region
        $region63: #{mlp_pallas.1} parent=23 // pred_check
          %p307 = pneg %p95
        $region64: #{mlp_pallas.1} parent=23 // pred_check_branch
          %309 = sbr.rel (%p307) target = $region66
        $region65: #{mlp_pallas.1} parent=23 // pred_region
          %s310 = smul.u32 2, %s19
          %p311 = scmp.lt.s32.totalorder %s310, 3
          %s312 = scalar_select %p311, %s310, 3
          %s313 = scalar_lea.vmem %s2, %s312
          %s314 = smul.u32 2, %s19
        $region66: #{mlp_pallas.1} parent=23 // pred_fallthru
          _
        // Predicated region
        $region67: #{mlp_pallas.1} parent=23 // pred_check
          %p315 = pneg %p121
        $region68: #{mlp_pallas.1} parent=23 // pred_check_branch
          %317 = sbr.rel (%p315) target = $region70
        $region69: #{mlp_pallas.1} parent=23 // pred_region
          %s318 = smul.u32 32, %s19
          %p319 = scmp.lt.s32.totalorder %s318, 63
          %s320 = scalar_select %p319, %s318, 63
          %s321 = smul.addr %s320, 4
          %s322 = scalar_lea.vmem %s3, %s321
          %s323 = smul.u32 32, %s19
        $region70: #{mlp_pallas.1} parent=23 // pred_fallthru
          _
      $region24: #{mlp_pallas.1} parent=5 // pred_fallthru
        _
      %p324 = scmp.le.s32.totalorder 1, %s11
      %p325 = scmp.lt.s32.totalorder %s11, 3
      %p326 = pnand %p324, %p325
      %p327 = pneg %p326
      // Predicated region
      $region71: #{mlp_pallas.1} parent=5 // pred_check
        _
      $region72: #{mlp_pallas.1} parent=5 // pred_check_branch
        %329 = sbr.rel (%p326) target = $region74
      $region73: #{mlp_pallas.1} parent=5 // pred_region
        %s330 = ssub.s32 %s11, 1
        %s331 = sand.u32 %s62, 1
        %s332 = sand.u32 %s62, 1
        %s333 = smul.addr %s332, 128
        %s334 = scalar_lea.vmem [#allocation3], %s333
        // Predicated region
        $region75: #{mlp_pallas.1} parent=73 // pred_check
          %p335 = pneg %p75
        $region76: #{mlp_pallas.1} parent=73 // pred_check_branch
          %337 = sbr.rel (%p335) target = $region78
        $region77: #{mlp_pallas.1} parent=73 // pred_region
          _
        $region78: #{mlp_pallas.1} parent=73 // pred_fallthru
          _
        %s338 = smul.u32 16, %s20
        %p339 = scmp.lt.s32.totalorder %s338, 15
        %s340 = scalar_select %p339, %s338, 15
        %s341 = smul.addr %s340, 4
        %s342 = scalar_lea.vmem %s0, %s341
        %p343 = pneg %p49
        %p344 = pneg %p46
        %s345 = sand.u32 %s62, 1
        %s346 = sand.u32 %s62, 1
        %s347 = smul.addr %s346, 128
        %s348 = scalar_lea.vmem [#allocation3], %s347
        %p349 = pneg %p75
        %p350 = pneg %p72
        %s351 = smul.u32 2, %s21
        %p352 = scmp.lt.s32.totalorder %s351, 3
        %s353 = scalar_select %p352, %s351, 3
        %s354 = scalar_lea.vmem %s2, %s353
        %p355 = pneg %p101
        %p356 = pneg %p98
        %s357 = smul.u32 32, %s21
        %p358 = scmp.lt.s32.totalorder %s357, 63
        %s359 = scalar_select %p358, %s357, 63
        %s360 = smul.addr %s359, 4
        %s361 = scalar_lea.vmem %s3, %s360
        %p362 = pneg %p127
        %p363 = pneg %p124
        %p364 = pneg %p148
        %p365 = pneg %p145
        %p366 = pneg %p174
        %p367 = pneg %p171
        %s368 = smul.u32 16, %s20
        %p369 = scmp.lt.s32.totalorder %s368, 15
        %s370 = scalar_select %p369, %s368, 15
        %s371 = smul.addr %s370, 8
        %s372 = scalar_lea.vmem %s5, %s371
        %s373 = smul.u32 16, %s20
        %p374 = scmp.lt.s32.totalorder %s373, 15
        %s375 = scalar_select %p374, %s373, 15
        %s376 = smul.addr %s375, 4
        %s377 = scalar_lea.vmem %s0, %s376
        %s378 = smul.u32 16, %s20
        %s379 = smul.u32 2, %s21
        %s380 = smul.u32 2, %s21
        %p381 = scmp.lt.s32.totalorder %s380, 3
        %s382 = scalar_select %p381, %s380, 3
        %s383 = scalar_lea.vmem %s2, %s382
        %s384 = smul.u32 2, %s21
        %s385 = smul.u32 32, %s21
        %p386 = scmp.lt.s32.totalorder %s385, 63
        %s387 = scalar_select %p386, %s385, 63
        %s388 = smul.addr %s387, 4
        %s389 = scalar_lea.vmem %s3, %s388
        %s390 = smul.u32 32, %s21
        %s391 = smul.u32 16, %s20
        %p392 = scmp.lt.s32.totalorder %s391, 15
        %s393 = scalar_select %p392, %s391, 15
        %s394 = smul.addr %s393, 8
        %s395 = scalar_lea.vmem %s5, %s394
        %s396 = smul.u32 16, %s20
        %p398 = scmp.eq.s32.totalorder %s21, 0
        // Predicated region
        $region79: #{mlp_pallas.1} parent=73 // pred_check
          %p399 = pneg %p398
        $region80: #{mlp_pallas.1} parent=73 // pred_check_branch
          %401 = sbr.rel (%p399) target = $region82
        $region81: #{mlp_pallas.1} parent=73 // pred_region
          %402 = vst [vmem:[#allocation2] sm:$0xff] 0.0
          %403 = vst [vmem:[#allocation2 + $0x8] sm:$0xff] 0.0
          %404 = vst [vmem:[#allocation2 + $0x10] sm:$0xff] 0.0
          %405 = vst [vmem:[#allocation2 + $0x18] sm:$0xff] 0.0
          %406 = vst [vmem:[#allocation2 + $0x20] sm:$0xff] 0.0
          %407 = vst [vmem:[#allocation2 + $0x28] sm:$0xff] 0.0
          %408 = vst [vmem:[#allocation2 + $0x30] sm:$0xff] 0.0
          %409 = vst [vmem:[#allocation2 + $0x38] sm:$0xff] 0.0
          %410 = vst [vmem:[#allocation2 + $0x40] sm:$0xff] 0.0
          %411 = vst [vmem:[#allocation2 + $0x48] sm:$0xff] 0.0
          %412 = vst [vmem:[#allocation2 + $0x50] sm:$0xff] 0.0
          %413 = vst [vmem:[#allocation2 + $0x58] sm:$0xff] 0.0
          %414 = vst [vmem:[#allocation2 + $0x60] sm:$0xff] 0.0
          %415 = vst [vmem:[#allocation2 + $0x68] sm:$0xff] 0.0
          %416 = vst [vmem:[#allocation2 + $0x70] sm:$0xff] 0.0
          %417 = vst [vmem:[#allocation2 + $0x78] sm:$0xff] 0.0
        $region82: #{mlp_pallas.1} parent=73 // pred_fallthru
          _
        %v418 = vld [vmem:[%s377] sm:$0xf]
        %v419 = vld [vmem:[%s377 + $0x4] sm:$0xf]
        %v420 = vld [vmem:[%s377 + $0x8] sm:$0xf]
        %v421 = vld [vmem:[%s377 + $0xc] sm:$0xf]
        %v422 = vld [vmem:[%s377 + $0x10] sm:$0xf]
        %v423 = vld [vmem:[%s377 + $0x14] sm:$0xf]
        %v424 = vld [vmem:[%s377 + $0x18] sm:$0xf]
        %v425 = vld [vmem:[%s377 + $0x1c] sm:$0xf]
        %v426 = vld [vmem:[%s377 + $0x20] sm:$0xf]
        %v427 = vld [vmem:[%s377 + $0x24] sm:$0xf]
        %v428 = vld [vmem:[%s377 + $0x28] sm:$0xf]
        %v429 = vld [vmem:[%s377 + $0x2c] sm:$0xf]
        %v430 = vld [vmem:[%s377 + $0x30] sm:$0xf]
        %v431 = vld [vmem:[%s377 + $0x34] sm:$0xf]
        %v432 = vld [vmem:[%s377 + $0x38] sm:$0xf]
        %v433 = vld [vmem:[%s377 + $0x3c] sm:$0xf]
        %v434 = vld [vmem:[%s334] sm:$0xff]
        %v435 = vld [vmem:[%s334 + $0x8] sm:$0xff]
        %v436 = vld [vmem:[%s334 + $0x10] sm:$0xff]
        %v437 = vld [vmem:[%s334 + $0x18] sm:$0xff]
        %v438 = vld [vmem:[%s334 + $0x20] sm:$0xff]
        %v439 = vld [vmem:[%s334 + $0x28] sm:$0xff]
        %v440 = vld [vmem:[%s334 + $0x30] sm:$0xff]
        %v441 = vld [vmem:[%s334 + $0x38] sm:$0xff]
        %v442 = vld [vmem:[%s334 + $0x40] sm:$0xff]
        %v443 = vld [vmem:[%s334 + $0x48] sm:$0xff]
        %v444 = vld [vmem:[%s334 + $0x50] sm:$0xff]
        %v445 = vld [vmem:[%s334 + $0x58] sm:$0xff]
        %v446 = vld [vmem:[%s334 + $0x60] sm:$0xff]
        %v447 = vld [vmem:[%s334 + $0x68] sm:$0xff]
        %v448 = vld [vmem:[%s334 + $0x70] sm:$0xff]
        %v449 = vld [vmem:[%s334 + $0x78] sm:$0xff]
        %v450 = vld [vmem:[%s383] sm:$0x3]
        %v452 = vlaneseq
        %v453 = vshrl.u32 %v452, 7
        %v454 = vsub.s32 0, %v453
        %v455 = vrot.slane %v450, %v454
        %v456 = vlaneseq
        %v457 = vshrl.u32 %v456, 7
        %v458 = vsub.s32 1, %v457
        %v459 = vrot.slane %v450, %v458
        %v478 = vunpack.c.l.b16 %v418
        %v479 = vunpack.c.l.b16 %v419
        %v480 = vunpack.c.l.b16 %v420
        %v481 = vunpack.c.l.b16 %v421
        %v482 = vunpack.c.l.b16 %v422
        %v483 = vunpack.c.l.b16 %v423
        %v484 = vunpack.c.l.b16 %v424
        %v485 = vunpack.c.l.b16 %v425
        %v486 = vunpack.c.l.b16 %v426
        %v487 = vunpack.c.l.b16 %v427
        %v488 = vunpack.c.l.b16 %v428
        %v489 = vunpack.c.l.b16 %v429
        %v490 = vunpack.c.l.b16 %v430
        %v491 = vunpack.c.l.b16 %v431
        %v492 = vunpack.c.l.b16 %v432
        %v493 = vunpack.c.l.b16 %v433
        %v494 = vpack.c.b16 %v479, %v478
        %v495 = vpack.c.b16 %v481, %v480
        %v496 = vpack.c.b16 %v483, %v482
        %v497 = vpack.c.b16 %v485, %v484
        %v498 = vpack.c.b16 %v487, %v486
        %v499 = vpack.c.b16 %v489, %v488
        %v500 = vpack.c.b16 %v491, %v490
        %v501 = vpack.c.b16 %v493, %v492
        %v526 = vunpack.c.l.b16 %v434
        %v527 = vunpack.c.h.b16 %v434
        %v528 = vunpack.c.l.b16 %v435
        %v529 = vunpack.c.h.b16 %v435
        %v530 = vunpack.c.l.b16 %v436
        %v531 = vunpack.c.h.b16 %v436
        %v532 = vunpack.c.l.b16 %v437
        %v533 = vunpack.c.h.b16 %v437
        %v534 = vunpack.c.l.b16 %v438
        %v535 = vunpack.c.h.b16 %v438
        %v536 = vunpack.c.l.b16 %v439
        %v537 = vunpack.c.h.b16 %v439
        %v538 = vunpack.c.l.b16 %v440
        %v539 = vunpack.c.h.b16 %v440
        %v540 = vunpack.c.l.b16 %v441
        %v541 = vunpack.c.h.b16 %v441
        %v542 = vunpack.c.l.b16 %v442
        %v543 = vunpack.c.h.b16 %v442
        %v544 = vunpack.c.l.b16 %v443
        %v545 = vunpack.c.h.b16 %v443
        %v546 = vunpack.c.l.b16 %v444
        %v547 = vunpack.c.h.b16 %v444
        %v548 = vunpack.c.l.b16 %v445
        %v549 = vunpack.c.h.b16 %v445
        %v550 = vunpack.c.l.b16 %v446
        %v551 = vunpack.c.h.b16 %v446
        %v552 = vunpack.c.l.b16 %v447
        %v553 = vunpack.c.h.b16 %v447
        %v554 = vunpack.c.l.b16 %v448
        %v555 = vunpack.c.h.b16 %v448
        %v556 = vunpack.c.l.b16 %v449
        %v557 = vunpack.c.h.b16 %v449
        %v558 = vpack.c.b16 %v528, %v526
        %v559 = vpack.c.b16 %v529, %v527
        %v560 = vpack.c.b16 %v532, %v530
        %v561 = vpack.c.b16 %v533, %v531
        %v562 = vpack.c.b16 %v536, %v534
        %v563 = vpack.c.b16 %v537, %v535
        %v564 = vpack.c.b16 %v540, %v538
        %v565 = vpack.c.b16 %v541, %v539
        %v566 = vpack.c.b16 %v544, %v542
        %v567 = vpack.c.b16 %v545, %v543
        %v568 = vpack.c.b16 %v548, %v546
        %v569 = vpack.c.b16 %v549, %v547
        %v570 = vpack.c.b16 %v552, %v550
        %v571 = vpack.c.b16 %v553, %v551
        %v572 = vpack.c.b16 %v556, %v554
        %v573 = vpack.c.b16 %v557, %v555
        %590 = vmatprep.subr.bf16.mxu0 %v559
        %591 = vmatpush1.bf16.msra.mxu0 %v558
        %592 = vmatprep.subr.bf16.mxu0 %v561
        %593 = vmatpush1.bf16.msra.mxu0 %v560
        %594 = vmatprep.subr.bf16.mxu0 %v563
        %595 = vmatpush1.bf16.msra.mxu0 %v562
        %596 = vmatprep.subr.bf16.mxu0 %v565
        %597 = vmatpush1.bf16.msra.mxu0 %v564
        %598 = vmatprep.subr.bf16.mxu0 %v567
        %599 = vmatpush1.bf16.msra.mxu0 %v566
        %600 = vmatprep.subr.bf16.mxu0 %v569
        %601 = vmatpush1.bf16.msra.mxu0 %v568
        %602 = vmatprep.subr.bf16.mxu0 %v571
        %603 = vmatpush1.bf16.msra.mxu0 %v570
        %604 = vmatprep.subr.bf16.mxu0 %v573
        %605 = vmatpush1.bf16.msra.mxu0 %v572
        %606 = vmatprep.subr.bf16.mxu0 0
        %607 = vmatpush1.bf16.msra.mxu0 0
        %608 = vmatprep.subr.bf16.mxu0 0
        %609 = vmatpush1.bf16.msra.mxu0 0
        %610 = vmatprep.subr.bf16.mxu0 0
        %611 = vmatpush1.bf16.msra.mxu0 0
        %612 = vmatprep.subr.bf16.mxu0 0
        %613 = vmatpush1.bf16.msra.mxu0 0
        %614 = vmatprep.subr.bf16.mxu0 0
        %615 = vmatpush1.bf16.msra.mxu0 0
        %616 = vmatprep.subr.bf16.mxu0 0
        %617 = vmatpush1.bf16.msra.mxu0 0
        %618 = vmatprep.subr.bf16.mxu0 0
        %619 = vmatpush1.bf16.msra.mxu0 0
        %620 = vmatprep.subr.bf16.mxu0 0
        %621 = vmatpush1.bf16.msra.mxu0 0
        %622 = vmatprep.mubr.bf16.mxu0 0
        %623 = vmatmul.mubr.bf16.gmra.mrb[0].mxu0 %v494
        %v624 = vpop.f32.mrb[0].mxu0
        %v625 = vadd.f32 %v455, %v624
        %v626 = vpop.f32.mrb[0].mxu0
        %v627 = vadd.f32 %v459, %v626
        %v628 = vpop.f32.mrb[0].mxu0
        %v629 = vadd.f32 %v455, %v628
        %v630 = vpop.f32.mrb[0].mxu0
        %v631 = vadd.f32 %v459, %v630
        %632 = vmatprep.mubr.bf16.mxu0 0
        %633 = vmatmul.mubr.bf16.gmra.mrb[0].mxu0 %v495
        %v634 = vpop.f32.mrb[0].mxu0
        %v635 = vadd.f32 %v455, %v634
        %v636 = vpop.f32.mrb[0].mxu0
        %v637 = vadd.f32 %v459, %v636
        %v638 = vpop.f32.mrb[0].mxu0
        %v639 = vadd.f32 %v455, %v638
        %v640 = vpop.f32.mrb[0].mxu0
        %v641 = vadd.f32 %v459, %v640
        %642 = vmatprep.mubr.bf16.mxu0 0
        %643 = vmatmul.mubr.bf16.gmra.mrb[0].mxu0 %v496
        %v644 = vpop.f32.mrb[0].mxu0
        %v645 = vadd.f32 %v455, %v644
        %v646 = vpop.f32.mrb[0].mxu0
        %v647 = vadd.f32 %v459, %v646
        %v648 = vpop.f32.mrb[0].mxu0
        %v649 = vadd.f32 %v455, %v648
        %v650 = vpop.f32.mrb[0].mxu0
        %v651 = vadd.f32 %v459, %v650
        %652 = vmatprep.mubr.bf16.mxu0 0
        %653 = vmatmul.mubr.bf16.gmra.mrb[0].mxu0 %v497
        %v654 = vpop.f32.mrb[0].mxu0
        %v655 = vadd.f32 %v455, %v654
        %v656 = vpop.f32.mrb[0].mxu0
        %v657 = vadd.f32 %v459, %v656
        %v658 = vpop.f32.mrb[0].mxu0
        %v659 = vadd.f32 %v455, %v658
        %v660 = vpop.f32.mrb[0].mxu0
        %v661 = vadd.f32 %v459, %v660
        %662 = vmatprep.mubr.bf16.mxu0 0
        %663 = vmatmul.mubr.bf16.gmra.mrb[0].mxu0 %v498
        %v664 = vpop.f32.mrb[0].mxu0
        %v665 = vadd.f32 %v455, %v664
        %v666 = vpop.f32.mrb[0].mxu0
        %v667 = vadd.f32 %v459, %v666
        %v668 = vpop.f32.mrb[0].mxu0
        %v669 = vadd.f32 %v455, %v668
        %v670 = vpop.f32.mrb[0].mxu0
        %v671 = vadd.f32 %v459, %v670
        %672 = vmatprep.mubr.bf16.mxu0 0
        %673 = vmatmul.mubr.bf16.gmra.mrb[0].mxu0 %v499
        %v674 = vpop.f32.mrb[0].mxu0
        %v675 = vadd.f32 %v455, %v674
        %v676 = vpop.f32.mrb[0].mxu0
        %v677 = vadd.f32 %v459, %v676
        %v678 = vpop.f32.mrb[0].mxu0
        %v679 = vadd.f32 %v455, %v678
        %v680 = vpop.f32.mrb[0].mxu0
        %v681 = vadd.f32 %v459, %v680
        %682 = vmatprep.mubr.bf16.mxu0 0
        %683 = vmatmul.mubr.bf16.gmra.mrb[0].mxu0 %v500
        %v684 = vpop.f32.mrb[0].mxu0
        %v685 = vadd.f32 %v455, %v684
        %v686 = vpop.f32.mrb[0].mxu0
        %v687 = vadd.f32 %v459, %v686
        %v688 = vpop.f32.mrb[0].mxu0
        %v689 = vadd.f32 %v455, %v688
        %v690 = vpop.f32.mrb[0].mxu0
        %v691 = vadd.f32 %v459, %v690
        %692 = vmatprep.mubr.bf16.mxu0 0
        %693 = vmatmul.mubr.bf16.gmra.mrb[0].mxu0 %v501
        %v694 = vpop.f32.mrb[0].mxu0
        %v695 = vadd.f32 %v455, %v694
        %v696 = vpop.f32.mrb[0].mxu0
        %v697 = vadd.f32 %v459, %v696
        %v698 = vpop.f32.mrb[0].mxu0
        %v699 = vadd.f32 %v455, %v698
        %v700 = vpop.f32.mrb[0].mxu0
        %v701 = vadd.f32 %v459, %v700
        %702 = vdwg.mxu0
        %v703 = vmul.f32 %v625, %v625
        %v704 = vmul.f32 %v627, %v627
        %v705 = vmul.f32 %v629, %v629
        %v706 = vmul.f32 %v631, %v631
        %v707 = vmul.f32 %v635, %v635
        %v708 = vmul.f32 %v637, %v637
        %v709 = vmul.f32 %v639, %v639
        %v710 = vmul.f32 %v641, %v641
        %v711 = vmul.f32 %v645, %v645
        %v712 = vmul.f32 %v647, %v647
        %v713 = vmul.f32 %v649, %v649
        %v714 = vmul.f32 %v651, %v651
        %v715 = vmul.f32 %v655, %v655
        %v716 = vmul.f32 %v657, %v657
        %v717 = vmul.f32 %v659, %v659
        %v718 = vmul.f32 %v661, %v661
        %v719 = vmul.f32 %v665, %v665
        %v720 = vmul.f32 %v667, %v667
        %v721 = vmul.f32 %v669, %v669
        %v722 = vmul.f32 %v671, %v671
        %v723 = vmul.f32 %v675, %v675
        %v724 = vmul.f32 %v677, %v677
        %v725 = vmul.f32 %v679, %v679
        %v726 = vmul.f32 %v681, %v681
        %v727 = vmul.f32 %v685, %v685
        %v728 = vmul.f32 %v687, %v687
        %v729 = vmul.f32 %v689, %v689
        %v730 = vmul.f32 %v691, %v691
        %v731 = vmul.f32 %v695, %v695
        %v732 = vmul.f32 %v697, %v697
        %v733 = vmul.f32 %v699, %v699
        %v734 = vmul.f32 %v701, %v701
        %v735 = vmul.f32 %v625, %v703
        %v736 = vmul.f32 %v627, %v704
        %v737 = vmul.f32 %v629, %v705
        %v738 = vmul.f32 %v631, %v706
        %v739 = vmul.f32 %v635, %v707
        %v740 = vmul.f32 %v637, %v708
        %v741 = vmul.f32 %v639, %v709
        %v742 = vmul.f32 %v641, %v710
        %v743 = vmul.f32 %v645, %v711
        %v744 = vmul.f32 %v647, %v712
        %v745 = vmul.f32 %v649, %v713
        %v746 = vmul.f32 %v651, %v714
        %v747 = vmul.f32 %v655, %v715
        %v748 = vmul.f32 %v657, %v716
        %v749 = vmul.f32 %v659, %v717
        %v750 = vmul.f32 %v661, %v718
        %v751 = vmul.f32 %v665, %v719
        %v752 = vmul.f32 %v667, %v720
        %v753 = vmul.f32 %v669, %v721
        %v754 = vmul.f32 %v671, %v722
        %v755 = vmul.f32 %v675, %v723
        %v756 = vmul.f32 %v677, %v724
        %v757 = vmul.f32 %v679, %v725
        %v758 = vmul.f32 %v681, %v726
        %v759 = vmul.f32 %v685, %v727
        %v760 = vmul.f32 %v687, %v728
        %v761 = vmul.f32 %v689, %v729
        %v762 = vmul.f32 %v691, %v730
        %v763 = vmul.f32 %v695, %v731
        %v764 = vmul.f32 %v697, %v732
        %v765 = vmul.f32 %v699, %v733
        %v766 = vmul.f32 %v701, %v734
        %v767 = vmul.f32 %v735, 0.044715
        %v768 = vmul.f32 %v736, 0.044715
        %v769 = vmul.f32 %v737, 0.044715
        %v770 = vmul.f32 %v738, 0.044715
        %v771 = vmul.f32 %v739, 0.044715
        %v772 = vmul.f32 %v740, 0.044715
        %v773 = vmul.f32 %v741, 0.044715
        %v774 = vmul.f32 %v742, 0.044715
        %v775 = vmul.f32 %v743, 0.044715
        %v776 = vmul.f32 %v744, 0.044715
        %v777 = vmul.f32 %v745, 0.044715
        %v778 = vmul.f32 %v746, 0.044715
        %v779 = vmul.f32 %v747, 0.044715
        %v780 = vmul.f32 %v748, 0.044715
        %v781 = vmul.f32 %v749, 0.044715
        %v782 = vmul.f32 %v750, 0.044715
        %v783 = vmul.f32 %v751, 0.044715
        %v784 = vmul.f32 %v752, 0.044715
        %v785 = vmul.f32 %v753, 0.044715
        %v786 = vmul.f32 %v754, 0.044715
        %v787 = vmul.f32 %v755, 0.044715
        %v788 = vmul.f32 %v756, 0.044715
        %v789 = vmul.f32 %v757, 0.044715
        %v790 = vmul.f32 %v758, 0.044715
        %v791 = vmul.f32 %v759, 0.044715
        %v792 = vmul.f32 %v760, 0.044715
        %v793 = vmul.f32 %v761, 0.044715
        %v794 = vmul.f32 %v762, 0.044715
        %v795 = vmul.f32 %v763, 0.044715
        %v796 = vmul.f32 %v764, 0.044715
        %v797 = vmul.f32 %v765, 0.044715
        %v798 = vmul.f32 %v766, 0.044715
        %v799 = vadd.f32 %v625, %v767
        %v800 = vadd.f32 %v627, %v768
        %v801 = vadd.f32 %v629, %v769
        %v802 = vadd.f32 %v631, %v770
        %v803 = vadd.f32 %v635, %v771
        %v804 = vadd.f32 %v637, %v772
        %v805 = vadd.f32 %v639, %v773
        %v806 = vadd.f32 %v641, %v774
        %v807 = vadd.f32 %v645, %v775
        %v808 = vadd.f32 %v647, %v776
        %v809 = vadd.f32 %v649, %v777
        %v810 = vadd.f32 %v651, %v778
        %v811 = vadd.f32 %v655, %v779
        %v812 = vadd.f32 %v657, %v780
        %v813 = vadd.f32 %v659, %v781
        %v814 = vadd.f32 %v661, %v782
        %v815 = vadd.f32 %v665, %v783
        %v816 = vadd.f32 %v667, %v784
        %v817 = vadd.f32 %v669, %v785
        %v818 = vadd.f32 %v671, %v786
        %v819 = vadd.f32 %v675, %v787
        %v820 = vadd.f32 %v677, %v788
        %v821 = vadd.f32 %v679, %v789
        %v822 = vadd.f32 %v681, %v790
        %v823 = vadd.f32 %v685, %v791
        %v824 = vadd.f32 %v687, %v792
        %v825 = vadd.f32 %v689, %v793
        %v826 = vadd.f32 %v691, %v794
        %v827 = vadd.f32 %v695, %v795
        %v828 = vadd.f32 %v697, %v796
        %v829 = vadd.f32 %v699, %v797
        %v830 = vadd.f32 %v701, %v798
        %v831 = vmul.f32 %v799, 0.7978846
        %v832 = vmul.f32 %v800, 0.7978846
        %v833 = vmul.f32 %v801, 0.7978846
        %v834 = vmul.f32 %v802, 0.7978846
        %v835 = vmul.f32 %v803, 0.7978846
        %v836 = vmul.f32 %v804, 0.7978846
        %v837 = vmul.f32 %v805, 0.7978846
        %v838 = vmul.f32 %v806, 0.7978846
        %v839 = vmul.f32 %v807, 0.7978846
        %v840 = vmul.f32 %v808, 0.7978846
        %v841 = vmul.f32 %v809, 0.7978846
        %v842 = vmul.f32 %v810, 0.7978846
        %v843 = vmul.f32 %v811, 0.7978846
        %v844 = vmul.f32 %v812, 0.7978846
        %v845 = vmul.f32 %v813, 0.7978846
        %v846 = vmul.f32 %v814, 0.7978846
        %v847 = vmul.f32 %v815, 0.7978846
        %v848 = vmul.f32 %v816, 0.7978846
        %v849 = vmul.f32 %v817, 0.7978846
        %v850 = vmul.f32 %v818, 0.7978846
        %v851 = vmul.f32 %v819, 0.7978846
        %v852 = vmul.f32 %v820, 0.7978846
        %v853 = vmul.f32 %v821, 0.7978846
        %v854 = vmul.f32 %v822, 0.7978846
        %v855 = vmul.f32 %v823, 0.7978846
        %v856 = vmul.f32 %v824, 0.7978846
        %v857 = vmul.f32 %v825, 0.7978846
        %v858 = vmul.f32 %v826, 0.7978846
        %v859 = vmul.f32 %v827, 0.7978846
        %v860 = vmul.f32 %v828, 0.7978846
        %v861 = vmul.f32 %v829, 0.7978846
        %v862 = vmul.f32 %v830, 0.7978846
        %v863 = vtanh.pop %v831
        %v864 = vtanh.pop %v832
        %v865 = vtanh.pop %v833
        %v866 = vtanh.pop %v834
        %v867 = vtanh.pop %v835
        %v868 = vtanh.pop %v836
        %v869 = vtanh.pop %v837
        %v870 = vtanh.pop %v838
        %v871 = vtanh.pop %v839
        %v872 = vtanh.pop %v840
        %v873 = vtanh.pop %v841
        %v874 = vtanh.pop %v842
        %v875 = vtanh.pop %v843
        %v876 = vtanh.pop %v844
        %v877 = vtanh.pop %v845
        %v878 = vtanh.pop %v846
        %v879 = vtanh.pop %v847
        %v880 = vtanh.pop %v848
        %v881 = vtanh.pop %v849
        %v882 = vtanh.pop %v850
        %v883 = vtanh.pop %v851
        %v884 = vtanh.pop %v852
        %v885 = vtanh.pop %v853
        %v886 = vtanh.pop %v854
        %v887 = vtanh.pop %v855
        %v888 = vtanh.pop %v856
        %v889 = vtanh.pop %v857
        %v890 = vtanh.pop %v858
        %v891 = vtanh.pop %v859
        %v892 = vtanh.pop %v860
        %v893 = vtanh.pop %v861
        %v894 = vtanh.pop %v862
        %v895 = vadd.f32 %v863, 1.0
        %v896 = vadd.f32 %v864, 1.0
        %v897 = vadd.f32 %v865, 1.0
        %v898 = vadd.f32 %v866, 1.0
        %v899 = vadd.f32 %v867, 1.0
        %v900 = vadd.f32 %v868, 1.0
        %v901 = vadd.f32 %v869, 1.0
        %v902 = vadd.f32 %v870, 1.0
        %v903 = vadd.f32 %v871, 1.0
        %v904 = vadd.f32 %v872, 1.0
        %v905 = vadd.f32 %v873, 1.0
        %v906 = vadd.f32 %v874, 1.0
        %v907 = vadd.f32 %v875, 1.0
        %v908 = vadd.f32 %v876, 1.0
        %v909 = vadd.f32 %v877, 1.0
        %v910 = vadd.f32 %v878, 1.0
        %v911 = vadd.f32 %v879, 1.0
        %v912 = vadd.f32 %v880, 1.0
        %v913 = vadd.f32 %v881, 1.0
        %v914 = vadd.f32 %v882, 1.0
        %v915 = vadd.f32 %v883, 1.0
        %v916 = vadd.f32 %v884, 1.0
        %v917 = vadd.f32 %v885, 1.0
        %v918 = vadd.f32 %v886, 1.0
        %v919 = vadd.f32 %v887, 1.0
        %v920 = vadd.f32 %v888, 1.0
        %v921 = vadd.f32 %v889, 1.0
        %v922 = vadd.f32 %v890, 1.0
        %v923 = vadd.f32 %v891, 1.0
        %v924 = vadd.f32 %v892, 1.0
        %v925 = vadd.f32 %v893, 1.0
        %v926 = vadd.f32 %v894, 1.0
        %v927 = vmul.f32 %v895, 0.5
        %v928 = vmul.f32 %v896, 0.5
        %v929 = vmul.f32 %v897, 0.5
        %v930 = vmul.f32 %v898, 0.5
        %v931 = vmul.f32 %v899, 0.5
        %v932 = vmul.f32 %v900, 0.5
        %v933 = vmul.f32 %v901, 0.5
        %v934 = vmul.f32 %v902, 0.5
        %v935 = vmul.f32 %v903, 0.5
        %v936 = vmul.f32 %v904, 0.5
        %v937 = vmul.f32 %v905, 0.5
        %v938 = vmul.f32 %v906, 0.5
        %v939 = vmul.f32 %v907, 0.5
        %v940 = vmul.f32 %v908, 0.5
        %v941 = vmul.f32 %v909, 0.5
        %v942 = vmul.f32 %v910, 0.5
        %v943 = vmul.f32 %v911, 0.5
        %v944 = vmul.f32 %v912, 0.5
        %v945 = vmul.f32 %v913, 0.5
        %v946 = vmul.f32 %v914, 0.5
        %v947 = vmul.f32 %v915, 0.5
        %v948 = vmul.f32 %v916, 0.5
        %v949 = vmul.f32 %v917, 0.5
        %v950 = vmul.f32 %v918, 0.5
        %v951 = vmul.f32 %v919, 0.5
        %v952 = vmul.f32 %v920, 0.5
        %v953 = vmul.f32 %v921, 0.5
        %v954 = vmul.f32 %v922, 0.5
        %v955 = vmul.f32 %v923, 0.5
        %v956 = vmul.f32 %v924, 0.5
        %v957 = vmul.f32 %v925, 0.5
        %v958 = vmul.f32 %v926, 0.5
        %v959 = vmul.f32 %v625, %v927
        %v960 = vmul.f32 %v627, %v928
        %v961 = vmul.f32 %v629, %v929
        %v962 = vmul.f32 %v631, %v930
        %v963 = vmul.f32 %v635, %v931
        %v964 = vmul.f32 %v637, %v932
        %v965 = vmul.f32 %v639, %v933
        %v966 = vmul.f32 %v641, %v934
        %v967 = vmul.f32 %v645, %v935
        %v968 = vmul.f32 %v647, %v936
        %v969 = vmul.f32 %v649, %v937
        %v970 = vmul.f32 %v651, %v938
        %v971 = vmul.f32 %v655, %v939
        %v972 = vmul.f32 %v657, %v940
        %v973 = vmul.f32 %v659, %v941
        %v974 = vmul.f32 %v661, %v942
        %v975 = vmul.f32 %v665, %v943
        %v976 = vmul.f32 %v667, %v944
        %v977 = vmul.f32 %v669, %v945
        %v978 = vmul.f32 %v671, %v946
        %v979 = vmul.f32 %v675, %v947
        %v980 = vmul.f32 %v677, %v948
        %v981 = vmul.f32 %v679, %v949
        %v982 = vmul.f32 %v681, %v950
        %v983 = vmul.f32 %v685, %v951
        %v984 = vmul.f32 %v687, %v952
        %v985 = vmul.f32 %v689, %v953
        %v986 = vmul.f32 %v691, %v954
        %v987 = vmul.f32 %v695, %v955
        %v988 = vmul.f32 %v697, %v956
        %v989 = vmul.f32 %v699, %v957
        %v990 = vmul.f32 %v701, %v958
        %v991 = vld [vmem:[#allocation2] sm:$0xff]
        %v992 = vld [vmem:[#allocation2 + $0x8] sm:$0xff]
        %v993 = vld [vmem:[#allocation2 + $0x10] sm:$0xff]
        %v994 = vld [vmem:[#allocation2 + $0x18] sm:$0xff]
        %v995 = vld [vmem:[#allocation2 + $0x20] sm:$0xff]
        %v996 = vld [vmem:[#allocation2 + $0x28] sm:$0xff]
        %v997 = vld [vmem:[#allocation2 + $0x30] sm:$0xff]
        %v998 = vld [vmem:[#allocation2 + $0x38] sm:$0xff]
        %v999 = vld [vmem:[#allocation2 + $0x40] sm:$0xff]
        %v1000 = vld [vmem:[#allocation2 + $0x48] sm:$0xff]
        %v1001 = vld [vmem:[#allocation2 + $0x50] sm:$0xff]
        %v1002 = vld [vmem:[#allocation2 + $0x58] sm:$0xff]
        %v1003 = vld [vmem:[#allocation2 + $0x60] sm:$0xff]
        %v1004 = vld [vmem:[#allocation2 + $0x68] sm:$0xff]
        %v1005 = vld [vmem:[#allocation2 + $0x70] sm:$0xff]
        %v1006 = vld [vmem:[#allocation2 + $0x78] sm:$0xff]
        %v1007 = vpack.c.bf16 %v961, %v959
        %v1008 = vpack.c.bf16 %v962, %v960
        %v1009 = vpack.c.bf16 %v965, %v963
        %v1010 = vpack.c.bf16 %v966, %v964
        %v1011 = vpack.c.bf16 %v969, %v967
        %v1012 = vpack.c.bf16 %v970, %v968
        %v1013 = vpack.c.bf16 %v973, %v971
        %v1014 = vpack.c.bf16 %v974, %v972
        %v1015 = vpack.c.bf16 %v977, %v975
        %v1016 = vpack.c.bf16 %v978, %v976
        %v1017 = vpack.c.bf16 %v981, %v979
        %v1018 = vpack.c.bf16 %v982, %v980
        %v1019 = vpack.c.bf16 %v985, %v983
        %v1020 = vpack.c.bf16 %v986, %v984
        %v1021 = vpack.c.bf16 %v989, %v987
        %v1022 = vpack.c.bf16 %v990, %v988
        %v1023 = vld [vmem:[%s389] sm:$0xf]
        %v1024 = vld [vmem:[%s389 + $0x4] sm:$0xf]
        %v1025 = vld [vmem:[%s389 + $0x8] sm:$0xf]
        %v1026 = vld [vmem:[%s389 + $0xc] sm:$0xf]
        %v1027 = vld [vmem:[%s389 + $0x10] sm:$0xf]
        %v1028 = vld [vmem:[%s389 + $0x14] sm:$0xf]
        %v1029 = vld [vmem:[%s389 + $0x18] sm:$0xf]
        %v1030 = vld [vmem:[%s389 + $0x1c] sm:$0xf]
        %v1031 = vld [vmem:[%s389 + $0x20] sm:$0xf]
        %v1032 = vld [vmem:[%s389 + $0x24] sm:$0xf]
        %v1033 = vld [vmem:[%s389 + $0x28] sm:$0xf]
        %v1034 = vld [vmem:[%s389 + $0x2c] sm:$0xf]
        %v1035 = vld [vmem:[%s389 + $0x30] sm:$0xf]
        %v1036 = vld [vmem:[%s389 + $0x34] sm:$0xf]
        %v1037 = vld [vmem:[%s389 + $0x38] sm:$0xf]
        %v1038 = vld [vmem:[%s389 + $0x3c] sm:$0xf]
        %v1039 = vld [vmem:[%s389 + $0x40] sm:$0xf]
        %v1040 = vld [vmem:[%s389 + $0x44] sm:$0xf]
        %v1041 = vld [vmem:[%s389 + $0x48] sm:$0xf]
        %v1042 = vld [vmem:[%s389 + $0x4c] sm:$0xf]
        %v1043 = vld [vmem:[%s389 + $0x50] sm:$0xf]
        %v1044 = vld [vmem:[%s389 + $0x54] sm:$0xf]
        %v1045 = vld [vmem:[%s389 + $0x58] sm:$0xf]
        %v1046 = vld [vmem:[%s389 + $0x5c] sm:$0xf]
        %v1047 = vld [vmem:[%s389 + $0x60] sm:$0xf]
        %v1048 = vld [vmem:[%s389 + $0x64] sm:$0xf]
        %v1049 = vld [vmem:[%s389 + $0x68] sm:$0xf]
        %v1050 = vld [vmem:[%s389 + $0x6c] sm:$0xf]
        %v1051 = vld [vmem:[%s389 + $0x70] sm:$0xf]
        %v1052 = vld [vmem:[%s389 + $0x74] sm:$0xf]
        %v1053 = vld [vmem:[%s389 + $0x78] sm:$0xf]
        %v1054 = vld [vmem:[%s389 + $0x7c] sm:$0xf]
        %v1087 = vunpack.c.l.b16 %v1023
        %v1088 = vunpack.c.l.b16 %v1024
        %v1089 = vunpack.c.l.b16 %v1025
        %v1090 = vunpack.c.l.b16 %v1026
        %v1091 = vunpack.c.l.b16 %v1027
        %v1092 = vunpack.c.l.b16 %v1028
        %v1093 = vunpack.c.l.b16 %v1029
        %v1094 = vunpack.c.l.b16 %v1030
        %v1095 = vunpack.c.l.b16 %v1031
        %v1096 = vunpack.c.l.b16 %v1032
        %v1097 = vunpack.c.l.b16 %v1033
        %v1098 = vunpack.c.l.b16 %v1034
        %v1099 = vunpack.c.l.b16 %v1035
        %v1100 = vunpack.c.l.b16 %v1036
        %v1101 = vunpack.c.l.b16 %v1037
        %v1102 = vunpack.c.l.b16 %v1038
        %v1103 = vunpack.c.l.b16 %v1039
        %v1104 = vunpack.c.l.b16 %v1040
        %v1105 = vunpack.c.l.b16 %v1041
        %v1106 = vunpack.c.l.b16 %v1042
        %v1107 = vunpack.c.l.b16 %v1043
        %v1108 = vunpack.c.l.b16 %v1044
        %v1109 = vunpack.c.l.b16 %v1045
        %v1110 = vunpack.c.l.b16 %v1046
        %v1111 = vunpack.c.l.b16 %v1047
        %v1112 = vunpack.c.l.b16 %v1048
        %v1113 = vunpack.c.l.b16 %v1049
        %v1114 = vunpack.c.l.b16 %v1050
        %v1115 = vunpack.c.l.b16 %v1051
        %v1116 = vunpack.c.l.b16 %v1052
        %v1117 = vunpack.c.l.b16 %v1053
        %v1118 = vunpack.c.l.b16 %v1054
        %v1119 = vpack.c.b16 %v1088, %v1087
        %v1120 = vpack.c.b16 %v1090, %v1089
        %v1121 = vpack.c.b16 %v1092, %v1091
        %v1122 = vpack.c.b16 %v1094, %v1093
        %v1123 = vpack.c.b16 %v1096, %v1095
        %v1124 = vpack.c.b16 %v1098, %v1097
        %v1125 = vpack.c.b16 %v1100, %v1099
        %v1126 = vpack.c.b16 %v1102, %v1101
        %v1127 = vpack.c.b16 %v1104, %v1103
        %v1128 = vpack.c.b16 %v1106, %v1105
        %v1129 = vpack.c.b16 %v1108, %v1107
        %v1130 = vpack.c.b16 %v1110, %v1109
        %v1131 = vpack.c.b16 %v1112, %v1111
        %v1132 = vpack.c.b16 %v1114, %v1113
        %v1133 = vpack.c.b16 %v1116, %v1115
        %v1134 = vpack.c.b16 %v1118, %v1117
        %1151 = vmatprep.subr.bf16.mxu0 0
        %1152 = vmatpush1.bf16.msra.mxu0 %v1119
        %1153 = vmatprep.subr.bf16.mxu0 0
        %1154 = vmatpush1.bf16.msra.mxu0 %v1120
        %1155 = vmatprep.subr.bf16.mxu0 0
        %1156 = vmatpush1.bf16.msra.mxu0 %v1121
        %1157 = vmatprep.subr.bf16.mxu0 0
        %1158 = vmatpush1.bf16.msra.mxu0 %v1122
        %1159 = vmatprep.subr.bf16.mxu0 0
        %1160 = vmatpush1.bf16.msra.mxu0 %v1123
        %1161 = vmatprep.subr.bf16.mxu0 0
        %1162 = vmatpush1.bf16.msra.mxu0 %v1124
        %1163 = vmatprep.subr.bf16.mxu0 0
        %1164 = vmatpush1.bf16.msra.mxu0 %v1125
        %1165 = vmatprep.subr.bf16.mxu0 0
        %1166 = vmatpush1.bf16.msra.mxu0 %v1126
        %1167 = vmatprep.subr.bf16.mxu0 0
        %1168 = vmatpush1.bf16.msra.mxu0 %v1127
        %1169 = vmatprep.subr.bf16.mxu0 0
        %1170 = vmatpush1.bf16.msra.mxu0 %v1128
        %1171 = vmatprep.subr.bf16.mxu0 0
        %1172 = vmatpush1.bf16.msra.mxu0 %v1129
        %1173 = vmatprep.subr.bf16.mxu0 0
        %1174 = vmatpush1.bf16.msra.mxu0 %v1130
        %1175 = vmatprep.subr.bf16.mxu0 0
        %1176 = vmatpush1.bf16.msra.mxu0 %v1131
        %1177 = vmatprep.subr.bf16.mxu0 0
        %1178 = vmatpush1.bf16.msra.mxu0 %v1132
        %1179 = vmatprep.subr.bf16.mxu0 0
        %1180 = vmatpush1.bf16.msra.mxu0 %v1133
        %1181 = vmatprep.subr.bf16.mxu0 0
        %1182 = vmatpush1.bf16.msra.mxu0 %v1134
        %1183 = vmatprep.mubr.bf16.mxu0 %v1008
        %1184 = vmatmul.mubr.bf16.gmra.mrb[0].mxu0 %v1007
        %v1185 = vpop.f32.mrb[0].mxu0
        %v1186 = vadd.f32 0.0, %v1185
        %v1187 = vpop.f32.mrb[0].mxu0
        %v1188 = vpop.f32.mrb[0].mxu0
        %v1189 = vadd.f32 0.0, %v1188
        %v1190 = vpop.f32.mrb[0].mxu0
        %1191 = vmatprep.mubr.bf16.mxu0 %v1010
        %1192 = vmatmul.mubr.bf16.gmra.mrb[0].mxu0 %v1009
        %v1193 = vpop.f32.mrb[0].mxu0
        %v1194 = vadd.f32 0.0, %v1193
        %v1195 = vpop.f32.mrb[0].mxu0
        %v1196 = vpop.f32.mrb[0].mxu0
        %v1197 = vadd.f32 0.0, %v1196
        %v1198 = vpop.f32.mrb[0].mxu0
        %1199 = vmatprep.mubr.bf16.mxu0 %v1012
        %1200 = vmatmul.mubr.bf16.gmra.mrb[0].mxu0 %v1011
        %v1201 = vpop.f32.mrb[0].mxu0
        %v1202 = vadd.f32 0.0, %v1201
        %v1203 = vpop.f32.mrb[0].mxu0
        %v1204 = vpop.f32.mrb[0].mxu0
        %v1205 = vadd.f32 0.0, %v1204
        %v1206 = vpop.f32.mrb[0].mxu0
        %1207 = vmatprep.mubr.bf16.mxu0 %v1014
        %1208 = vmatmul.mubr.bf16.gmra.mrb[0].mxu0 %v1013
        %v1209 = vpop.f32.mrb[0].mxu0
        %v1210 = vadd.f32 0.0, %v1209
        %v1211 = vpop.f32.mrb[0].mxu0
        %v1212 = vpop.f32.mrb[0].mxu0
        %v1213 = vadd.f32 0.0, %v1212
        %v1214 = vpop.f32.mrb[0].mxu0
        %1215 = vmatprep.mubr.bf16.mxu0 %v1016
        %1216 = vmatmul.mubr.bf16.gmra.mrb[0].mxu0 %v1015
        %v1217 = vpop.f32.mrb[0].mxu0
        %v1218 = vadd.f32 0.0, %v1217
        %v1219 = vpop.f32.mrb[0].mxu0
        %v1220 = vpop.f32.mrb[0].mxu0
        %v1221 = vadd.f32 0.0, %v1220
        %v1222 = vpop.f32.mrb[0].mxu0
        %1223 = vmatprep.mubr.bf16.mxu0 %v1018
        %1224 = vmatmul.mubr.bf16.gmra.mrb[0].mxu0 %v1017
        %v1225 = vpop.f32.mrb[0].mxu0
        %v1226 = vadd.f32 0.0, %v1225
        %v1227 = vpop.f32.mrb[0].mxu0
        %v1228 = vpop.f32.mrb[0].mxu0
        %v1229 = vadd.f32 0.0, %v1228
        %v1230 = vpop.f32.mrb[0].mxu0
        %1231 = vmatprep.mubr.bf16.mxu0 %v1020
        %1232 = vmatmul.mubr.bf16.gmra.mrb[0].mxu0 %v1019
        %v1233 = vpop.f32.mrb[0].mxu0
        %v1234 = vadd.f32 0.0, %v1233
        %v1235 = vpop.f32.mrb[0].mxu0
        %v1236 = vpop.f32.mrb[0].mxu0
        %v1237 = vadd.f32 0.0, %v1236
        %v1238 = vpop.f32.mrb[0].mxu0
        %1239 = vmatprep.mubr.bf16.mxu0 %v1022
        %1240 = vmatmul.mubr.bf16.gmra.mrb[0].mxu0 %v1021
        %v1241 = vpop.f32.mrb[0].mxu0
        %v1242 = vadd.f32 0.0, %v1241
        %v1243 = vpop.f32.mrb[0].mxu0
        %v1244 = vpop.f32.mrb[0].mxu0
        %v1245 = vadd.f32 0.0, %v1244
        %v1246 = vpop.f32.mrb[0].mxu0
        %1247 = vdwg.mxu0
        %v1248 = vadd.f32 %v991, %v1186
        %v1249 = vadd.f32 %v992, %v1189
        %v1250 = vadd.f32 %v993, %v1194
        %v1251 = vadd.f32 %v994, %v1197
        %v1252 = vadd.f32 %v995, %v1202
        %v1253 = vadd.f32 %v996, %v1205
        %v1254 = vadd.f32 %v997, %v1210
        %v1255 = vadd.f32 %v998, %v1213
        %v1256 = vadd.f32 %v999, %v1218
        %v1257 = vadd.f32 %v1000, %v1221
        %v1258 = vadd.f32 %v1001, %v1226
        %v1259 = vadd.f32 %v1002, %v1229
        %v1260 = vadd.f32 %v1003, %v1234
        %v1261 = vadd.f32 %v1004, %v1237
        %v1262 = vadd.f32 %v1005, %v1242
        %v1263 = vadd.f32 %v1006, %v1245
        %1264 = vst [vmem:[#allocation2] sm:$0xff] %v1248
        %1265 = vst [vmem:[#allocation2 + $0x8] sm:$0xff] %v1249
        %1266 = vst [vmem:[#allocation2 + $0x10] sm:$0xff] %v1250
        %1267 = vst [vmem:[#allocation2 + $0x18] sm:$0xff] %v1251
        %1268 = vst [vmem:[#allocation2 + $0x20] sm:$0xff] %v1252
        %1269 = vst [vmem:[#allocation2 + $0x28] sm:$0xff] %v1253
        %1270 = vst [vmem:[#allocation2 + $0x30] sm:$0xff] %v1254
        %1271 = vst [vmem:[#allocation2 + $0x38] sm:$0xff] %v1255
        %1272 = vst [vmem:[#allocation2 + $0x40] sm:$0xff] %v1256
        %1273 = vst [vmem:[#allocation2 + $0x48] sm:$0xff] %v1257
        %1274 = vst [vmem:[#allocation2 + $0x50] sm:$0xff] %v1258
        %1275 = vst [vmem:[#allocation2 + $0x58] sm:$0xff] %v1259
        %1276 = vst [vmem:[#allocation2 + $0x60] sm:$0xff] %v1260
        %1277 = vst [vmem:[#allocation2 + $0x68] sm:$0xff] %v1261
        %1278 = vst [vmem:[#allocation2 + $0x70] sm:$0xff] %v1262
        %1279 = vst [vmem:[#allocation2 + $0x78] sm:$0xff] %v1263
        %p1280 = scmp.eq.s32.totalorder %s21, 1
        // Predicated region
        $region83: #{mlp_pallas.1} parent=73 // pred_check
          %p1281 = pneg %p1280
        $region84: #{mlp_pallas.1} parent=73 // pred_check_branch
          %1283 = sbr.rel (%p1281) target = $region86
        $region85: #{mlp_pallas.1} parent=73 // pred_region
          %v1284 = vld [vmem:[#allocation2] sm:$0xff]
          %v1285 = vld [vmem:[#allocation2 + $0x8] sm:$0xff]
          %v1286 = vld [vmem:[#allocation2 + $0x10] sm:$0xff]
          %v1287 = vld [vmem:[#allocation2 + $0x18] sm:$0xff]
          %v1288 = vld [vmem:[#allocation2 + $0x20] sm:$0xff]
          %v1289 = vld [vmem:[#allocation2 + $0x28] sm:$0xff]
          %v1290 = vld [vmem:[#allocation2 + $0x30] sm:$0xff]
          %v1291 = vld [vmem:[#allocation2 + $0x38] sm:$0xff]
          %v1292 = vld [vmem:[#allocation2 + $0x40] sm:$0xff]
          %v1293 = vld [vmem:[#allocation2 + $0x48] sm:$0xff]
          %v1294 = vld [vmem:[#allocation2 + $0x50] sm:$0xff]
          %v1295 = vld [vmem:[#allocation2 + $0x58] sm:$0xff]
          %v1296 = vld [vmem:[#allocation2 + $0x60] sm:$0xff]
          %v1297 = vld [vmem:[#allocation2 + $0x68] sm:$0xff]
          %v1298 = vld [vmem:[#allocation2 + $0x70] sm:$0xff]
          %v1299 = vld [vmem:[#allocation2 + $0x78] sm:$0xff]
          %v1300 = vld [vmem:[%s4] sm:$0x1]
          %v1302 = vlaneseq
          %v1303 = vshrl.u32 %v1302, 7
          %v1304 = vsub.s32 0, %v1303
          %v1305 = vrot.slane %v1300, %v1304
          %v1307 = vadd.f32 %v1284, %v1305
          %v1308 = vadd.f32 %v1285, %v1305
          %v1309 = vadd.f32 %v1286, %v1305
          %v1310 = vadd.f32 %v1287, %v1305
          %v1311 = vadd.f32 %v1288, %v1305
          %v1312 = vadd.f32 %v1289, %v1305
          %v1313 = vadd.f32 %v1290, %v1305
          %v1314 = vadd.f32 %v1291, %v1305
          %v1315 = vadd.f32 %v1292, %v1305
          %v1316 = vadd.f32 %v1293, %v1305
          %v1317 = vadd.f32 %v1294, %v1305
          %v1318 = vadd.f32 %v1295, %v1305
          %v1319 = vadd.f32 %v1296, %v1305
          %v1320 = vadd.f32 %v1297, %v1305
          %v1321 = vadd.f32 %v1298, %v1305
          %v1322 = vadd.f32 %v1299, %v1305
          %1323 = vst [vmem:[%s395] sm:$0xff] %v1307
          %1324 = vst [vmem:[%s395 + $0x8] sm:$0xff] %v1308
          %1325 = vst [vmem:[%s395 + $0x10] sm:$0xff] %v1309
          %1326 = vst [vmem:[%s395 + $0x18] sm:$0xff] %v1310
          %1327 = vst [vmem:[%s395 + $0x20] sm:$0xff] %v1311
          %1328 = vst [vmem:[%s395 + $0x28] sm:$0xff] %v1312
          %1329 = vst [vmem:[%s395 + $0x30] sm:$0xff] %v1313
          %1330 = vst [vmem:[%s395 + $0x38] sm:$0xff] %v1314
          %1331 = vst [vmem:[%s395 + $0x40] sm:$0xff] %v1315
          %1332 = vst [vmem:[%s395 + $0x48] sm:$0xff] %v1316
          %1333 = vst [vmem:[%s395 + $0x50] sm:$0xff] %v1317
          %1334 = vst [vmem:[%s395 + $0x58] sm:$0xff] %v1318
          %1335 = vst [vmem:[%s395 + $0x60] sm:$0xff] %v1319
          %1336 = vst [vmem:[%s395 + $0x68] sm:$0xff] %v1320
          %1337 = vst [vmem:[%s395 + $0x70] sm:$0xff] %v1321
          %1338 = vst [vmem:[%s395 + $0x78] sm:$0xff] %v1322
        $region86: #{mlp_pallas.1} parent=73 // pred_fallthru
          _
        %s1339 = smul.u32 16, %s20
        %p1340 = scmp.lt.s32.totalorder %s1339, 15
        %s1341 = scalar_select %p1340, %s1339, 15
        %s1342 = smul.addr %s1341, 8
        %s1343 = scalar_lea.vmem %s5, %s1342
        // Predicated region
        $region87: #{mlp_pallas.1} parent=73 // pred_check
          %p1344 = pneg %p171
        $region88: #{mlp_pallas.1} parent=73 // pred_check_branch
          %1346 = sbr.rel (%p1344) target = $region90
        $region89: #{mlp_pallas.1} parent=73 // pred_region
          %s1347 = smul.u32 16, %s20
        $region90: #{mlp_pallas.1} parent=73 // pred_fallthru
          _
        // Predicated region
        $region91: #{mlp_pallas.1} parent=73 // pred_check
          %p1348 = pneg %p171
        $region92: #{mlp_pallas.1} parent=73 // pred_check_branch
          %1350 = sbr.rel (%p1348) target = $region94
        $region93: #{mlp_pallas.1} parent=73 // pred_region
          %s1351 = smul.u32 16, %s20
          %p1352 = scmp.lt.s32.totalorder %s1351, 15
          %s1353 = scalar_select %p1352, %s1351, 15
          %s1354 = smul.addr %s1353, 8
          %s1355 = scalar_lea.vmem %s5, %s1354
        $region94: #{mlp_pallas.1} parent=73 // pred_fallthru
          _
      $region74: #{mlp_pallas.1} parent=5 // pred_fallthru
        _
      %p1356 = scmp.le.s32.totalorder 2, %s11
      // Predicated region
      $region95: #{mlp_pallas.1} parent=5 // pred_check
        %p1357 = pneg %p1356
      $region96: #{mlp_pallas.1} parent=5 // pred_check_branch
        %1359 = sbr.rel (%p1357) target = $region98
      $region97: #{mlp_pallas.1} parent=5 // pred_region
        %s1360 = ssub.s32 %s11, 2
      $region98: #{mlp_pallas.1} parent=5 // pred_fallthru
        _
    $region6: #{mlp_pallas.1} parent=1 // loop_footer
      %s15 = sadd.s32 1, %s11
    $region7: #{mlp_pallas.1} parent=1 // loop_footer_branch
      %10 = sbr.rel target = $region3
    $region8: #{mlp_pallas.1} parent=1 // loop_exit
      _

</llo_original>
